<compile_context>
chip_gen: v6e
topology: v6e:2x2x1
jax: 0.10.0
libtpu: 0.0.40
codegen_flags: <defaults>
</compile_context>

<pallas_src>
import functools

import jax
import jax.numpy as jnp
from jax.experimental import pallas as pl
from jax.experimental.pallas import tpu as pltpu


def _round_up(x, m):
    return (x + m - 1) // m * m


# --------------------------------------------------------------------------- #
# Kernel
# --------------------------------------------------------------------------- #
def _ffn_step(x_ref, w1_ref, b1_ref, w2_ref, b2_ref, o_ref, acc_ref, tf):
    """One (token-tile, d_ff-chunk) grid step.

    x_ref:  (tm, d_model)   token tile, resident across the d_ff axis
    w1_ref: (d_model, tf)   W1 chunk (streamed; whole W1 when weight-resident)
    b1_ref: (1, d_ff_p)     full b1, resident; sliced in-kernel
    w2_ref: (tf, d_model)   W2 chunk
    b2_ref: (1, d_model)    b2
    o_ref:  (tm, d_model)   output tile, resident across the d_ff axis
    acc_ref:(tm, d_model)   f32 accumulator (VMEM scratch, or o_ref itself if f32)
    """
    k = pl.program_id(1)

    @pl.when(k == 0)
    def _():
        acc_ref[...] = jnp.zeros_like(acc_ref)

    # GEMM 1 on the MXU with f32 accumulation; bias + ReLU on the VPU.
    off = pl.multiple_of(k * tf, 128)
    h = jnp.dot(x_ref[...], w1_ref[...], preferred_element_type=jnp.float32)
    h = jnp.maximum(h + b1_ref[:, pl.ds(off, tf)].astype(jnp.float32), 0.0)

    # TODO(synk): training-mode dropout (pltpu.prng_seed / prng_random_bits mask)
    # not implemented; eval-mode dropout is the identity.

    # GEMM 2: feed the MXU in the weight's storage dtype (bf16-friendly), f32 acc.
    acc_ref[...] += jnp.dot(h.astype(w2_ref.dtype), w2_ref[...],
                            preferred_element_type=jnp.float32)

    @pl.when(k == pl.num_programs(1) - 1)
    def _():
        o_ref[...] = (acc_ref[...]
                      + b2_ref[...].astype(jnp.float32)).astype(o_ref.dtype)


def _ffn_kernel_scratch(x_ref, w1_ref, b1_ref, w2_ref, b2_ref, o_ref, acc_ref,
                        *, tf):
    _ffn_step(x_ref, w1_ref, b1_ref, w2_ref, b2_ref, o_ref, acc_ref, tf)


def _ffn_kernel_inplace(x_ref, w1_ref, b1_ref, w2_ref, b2_ref, o_ref, *, tf):
    # f32 output: accumulate directly into the resident output block (no scratch).
    _ffn_step(x_ref, w1_ref, b1_ref, w2_ref, b2_ref, o_ref, o_ref, tf)


# --------------------------------------------------------------------------- #
# VMEM budgeting / tile selection
# --------------------------------------------------------------------------- #
def _vmem_budget_bytes():
    cap = None
    try:
        cap = int(getattr(pltpu.get_tpu_info(), "vmem_capacity_bytes", 0)) or None
    except Exception:
        cap = None
    if cap is None:
        cap = 64 << 20                      # conservative: v7x per-TensorCore VMEM
    budget = min(int(cap * 0.80), 100 << 20)
    try:
        kind = jax.devices()[0].device_kind.lower()
    except Exception:
        kind = ""
    if ("v7" in kind) or ("tpu7" in kind):  # belt-and-braces: v7x has 64 MiB / TC
        budget = min(budget, 48 << 20)
    return budget


def _footprint_bytes(tm, tf, *, d_model, d_ff_p, x_bytes, w_bytes, out_bytes,
                     acc_in_out):
    """Estimated per-step VMEM use (default double-buffered BlockSpec pipeline)."""
    fp = 2 * tm * d_model * (x_bytes + out_bytes)          # x tile + out tile
    fp += 2 * 2 * d_model * tf * w_bytes                   # W1 + W2 chunks
    fp += 2 * (d_ff_p + d_model) * w_bytes                 # b1 (full) + b2
    fp += tm * tf * 4                                      # h (f32 intermediate)
    if w_bytes < 4:
        fp += tm * tf * w_bytes                            # h cast copy for GEMM 2
    if not acc_in_out:
        fp += tm * d_model * 4                             # f32 accumulator scratch
    return fp + (2 << 20)                                  # headroom / internal scratch


# --------------------------------------------------------------------------- #
# Wrapper
# --------------------------------------------------------------------------- #
def positionwise_feed_forward(x, w1, b1, w2, b2, *, tm=None, tf=None):
    """Transformer FFN.  x: (B, S, d_model); w1: (d_model, d_ff); w2: (d_ff, d_model)."""
    B, S, d_model = x.shape
    d_ff = w1.shape[1]
    N = B * S

    x_bytes = x.dtype.itemsize
    out_bytes = x_bytes
    w_bytes = w1.dtype.itemsize
    acc_in_out = (x.dtype == jnp.float32)    # f32 output -> accumulate in o_ref

    # Pad d_ff to a multiple of 256 so streamed chunks keep the 256-wide MXU
    # contraction full and stay (8,128)-aligned; exact no-op through ReLU.
    d_ff_p = _round_up(d_ff, 256)

    vmem_budget = _vmem_budget_bytes()
    fp = functools.partial(_footprint_bytes, d_model=d_model, d_ff_p=d_ff_p,
                           x_bytes=x_bytes, w_bytes=w_bytes, out_bytes=out_bytes,
                           acc_in_out=acc_in_out)

    # ---- token-tile candidates: as big as VMEM allows (amortizes any weight
    #      re-streaming), never larger than the (padded) token count. ----
    n_rows = _round_up(max(N, 8), 8)
    tm_target = 1024 if vmem_budget >= (96 << 20) else 512
    if tm is not None:
        tm_cands = [_round_up(tm, 8)]
    else:
        tm_cap = min(tm_target, n_rows)
        tm_cands = [t for t in (1024, 512, 256, 128, 64, 32, 16, 8) if t <= tm_cap]
        if not tm_cands or tm_cands[0] != tm_cap:
            tm_cands = [tm_cap] + tm_cands

    # ---- d_ff-chunk candidates: multiples of 256 that divide the padded d_ff. ----
    if tf is not None:
        assert tf % 128 == 0 and d_ff_p % tf == 0, "tf must divide padded d_ff"
        tf_cands = [tf]
    else:
        tf_cands = [t for t in range(min(d_ff_p, 2048), 255, -256)
                    if d_ff_p % t == 0]

    chosen = None
    # 1) Weight-resident fast path: constant W1/W2 block index -> DMA'd once.
    if tf is None or tf == d_ff_p:
        for tm_c in tm_cands:
            if fp(tm_c, d_ff_p) <= vmem_budget:
                chosen = (tm_c, d_ff_p)
                break
    # 2) Streamed weights: largest token tile first, then largest d_ff chunk.
    if chosen is None:
        for tm_c in tm_cands:
            for tf_c in tf_cands:
                if fp(tm_c, tf_c) <= vmem_budget:
                    chosen = (tm_c, tf_c)
                    break
            if chosen is not None:
                break
    if chosen is None:                                     # last resort
        chosen = (tm_cands[-1], tf_cands[-1])
    tm, tf = chosen

    Np = _round_up(N, tm)

    # ---- pad operands (padded rows/cols are exact no-ops and sliced off). ----
    x2d = x.reshape(N, d_model)
    if Np != N:
        x2d = jnp.pad(x2d, ((0, Np - N), (0, 0)))
    if d_ff_p != d_ff:
        w1 = jnp.pad(w1, ((0, 0), (0, d_ff_p - d_ff)))
        b1 = jnp.pad(b1, ((0, d_ff_p - d_ff),))
        w2 = jnp.pad(w2, ((0, d_ff_p - d_ff), (0, 0)))
    b1_2d = b1.reshape(1, d_ff_p)
    b2_2d = b2.reshape(1, d_model)

    grid = (Np // tm, d_ff_p // tf)
    weight_resident = (tf == d_ff_p)

    # Weights are re-streamed once per token tile unless resident.
    weight_reads = 1 if weight_resident else grid[0]
    cost = pl.CostEstimate(
        flops=4 * Np * d_model * d_ff_p,                        # two GEMMs
        transcendentals=0,
        bytes_accessed=(Np * d_model * (x_bytes + out_bytes)            # x in, y out
                        + weight_reads * 2 * d_model * d_ff_p * w_bytes  # W1 + W2
                        + (d_ff_p + d_model) * w_bytes))                 # biases

    vmem_limit = int(min(vmem_budget, max(32 << 20, fp(tm, tf) + (4 << 20))))

    kernel = (functools.partial(_ffn_kernel_inplace, tf=tf) if acc_in_out
              else functools.partial(_ffn_kernel_scratch, tf=tf))
    scratch_shapes = [] if acc_in_out else [pltpu.VMEM((tm, d_model), jnp.float32)]

    out2d = pl.pallas_call(
        kernel,
        out_shape=jax.ShapeDtypeStruct((Np, d_model), x.dtype),
        grid_spec=pltpu.PrefetchScalarGridSpec(
            num_scalar_prefetch=0,
            grid=grid,
            in_specs=[
                pl.BlockSpec((tm, d_model), lambda i, k: (i, 0)),    # x tile
                pl.BlockSpec((d_model, tf), lambda i, k: (0, k)),    # W1 chunk
                pl.BlockSpec((1, d_ff_p), lambda i, k: (0, 0)),      # b1 (resident)
                pl.BlockSpec((tf, d_model), lambda i, k: (k, 0)),    # W2 chunk
                pl.BlockSpec((1, d_model), lambda i, k: (0, 0)),     # b2
            ],
            out_specs=pl.BlockSpec((tm, d_model), lambda i, k: (i, 0)),
            scratch_shapes=scratch_shapes,
        ),
        compiler_params=pltpu.CompilerParams(
            # Token axis shards across v7x's two TensorCores; the d_ff axis is the
            # reduction and stays "arbitrary" (last).  With weight-resident / big
            # token tiles the kernel is MXU bound, so the 2-TC split pays off.
            dimension_semantics=("parallel", "arbitrary"),
            vmem_limit_bytes=vmem_limit),
        cost_estimate=cost,
    )(x2d, w1, b1_2d, w2, b2_2d)

    return out2d[:N].reshape(B, S, d_model)


def init_params(key, d_model, dtype=jnp.float32):
    """Params matching nn.Linear shapes (stored transposed: (in, out))."""
    d_ff = 4 * d_model
    k1, k2, k3, k4 = jax.random.split(key, 4)
    lim1 = 1.0 / jnp.sqrt(d_model)
    lim2 = 1.0 / jnp.sqrt(d_ff)
    w1 = jax.random.uniform(k1, (d_model, d_ff), dtype, -lim1, lim1)
    b1 = jax.random.uniform(k2, (d_ff,), dtype, -lim1, lim1)
    w2 = jax.random.uniform(k3, (d_ff, d_model), dtype, -lim2, lim2)
    b2 = jax.random.uniform(k4, (d_model,), dtype, -lim2, lim2)
    return w1, b1, w2, b2


if __name__ == "__main__":
    def ref_ffn(x, w1, b1, w2, b2):
        f32 = jnp.float32
        h = jnp.maximum(x.astype(f32) @ w1.astype(f32) + b1.astype(f32), 0.0)
        return h @ w2.astype(f32) + b2.astype(f32)

    key = jax.random.PRNGKey(0)
    kx, kp = jax.random.split(key)

    # --- 1) f32, d_model=128 (d_ff=512), auto tiling -> weight-resident path ---
    B, S, d_model = 2, 8, 128
    x = jax.random.normal(kx, (B, S, d_model), jnp.float32)
    w1, b1, w2, b2 = init_params(kp, d_model, jnp.float32)
    ref = ref_ffn(x, w1, b1, w2, b2)

    y = jax.block_until_ready(positionwise_feed_forward(x, w1, b1, w2, b2))
    assert y.shape == (B, S, d_model)
    assert jnp.allclose(y, ref, atol=2e-3, rtol=2e-3)

    # --- 2) same shapes, forced streamed-d_ff path (tf=256 -> 2 k-steps) ---
    y2 = jax.block_until_ready(positionwise_feed_forward(x, w1, b1, w2, b2, tf=256))
    assert jnp.allclose(y2, ref, atol=2e-3, rtol=2e-3)

    # --- 3) bf16 params/activations (scratch-accumulator kernel variant) ---
    xb = x.astype(jnp.bfloat16)
    pb = tuple(p.astype(jnp.bfloat16) for p in (w1, b1, w2, b2))
    y3 = jax.block_until_ready(positionwise_feed_forward(xb, *pb))
    ref3 = ref_ffn(xb, *pb)
    assert jnp.allclose(y3.astype(jnp.float32), ref3, atol=3e-2, rtol=3e-2)

    # --- 4) d_model=96 -> d_ff=384 (zero-padded to 512), streamed with tf=256 ---
    kx4, kp4 = jax.random.split(jax.random.PRNGKey(1))
    x4 = jax.random.normal(kx4, (2, 8, 96), jnp.float32)
    p4 = init_params(kp4, 96, jnp.float32)
    y4 = jax.block_until_ready(positionwise_feed_forward(x4, *p4, tf=256))
    ref4 = ref_ffn(x4, *p4)
    assert jnp.allclose(y4, ref4, atol=2e-3, rtol=2e-3)

    print("KERNEL_OK")
</pallas_src>

<mosaic_0001>
module attributes {stable_mosaic.version = 11 : i64} {
  func.func @_ffn_kernel_inplace(%arg0: i32, %arg1: i32, %arg2: memref<16x128xf32, #tpu.memory_space<vmem>>, %arg3: memref<128x512xf32, #tpu.memory_space<vmem>>, %arg4: memref<1x512xf32, #tpu.memory_space<vmem>>, %arg5: memref<512x128xf32, #tpu.memory_space<vmem>>, %arg6: memref<1x128xf32, #tpu.memory_space<vmem>>, %arg7: memref<16x128xf32, #tpu.memory_space<vmem>>) attributes {dimension_semantics = [#tpu.dimension_semantics<parallel>, #tpu.dimension_semantics<arbitrary>], iteration_bounds = array<i64: 1, 1>, scalar_prefetch = 0 : i64, scratch_operands = 0 : i64, tpu.core_type = #tpu.core_type<tc>, window_params = [{transform_indices = @transform_0, window_bounds = array<i64: 16, 128>}, {transform_indices = @transform_1, window_bounds = array<i64: 128, 512>}, {pipeline_mode = #tpu.pipeline_mode<synchronous>, transform_indices = @transform_2, window_bounds = array<i64: 1, 512>}, {transform_indices = @transform_3, window_bounds = array<i64: 512, 128>}, {pipeline_mode = #tpu.pipeline_mode<synchronous>, transform_indices = @transform_4, window_bounds = array<i64: 1, 128>}, {transform_indices = @transform_5, window_bounds = array<i64: 16, 128>}]} {
    %c0_i32 = arith.constant 0 : i32
    %0 = arith.cmpi eq, %arg1, %c0_i32 : i32
    %1 = arith.extui %0 : i1 to i32
    %c0_i32_0 = arith.constant 0 : i32
    %2 = arith.cmpi ne, %1, %c0_i32_0 : i32
    scf.if %2 {
      %cst_15 = arith.constant 0.000000e+00 : f32
      %22 = vector.broadcast %cst_15 : f32 to vector<16x128xf32>
      %c0_16 = arith.constant 0 : index
      %c0_17 = arith.constant 0 : index
      %23 = vector.load %arg7[%c0_16, %c0_17] : memref<16x128xf32, #tpu.memory_space<vmem>>, vector<16x128xf32>
      tpu.vector_store %arg7[%c0_16, %c0_17], %22 {strides = array<i32>} : memref<16x128xf32, #tpu.memory_space<vmem>>, vector<16x128xf32>,
    } else {
    }
    %c512_i32 = arith.constant 512 : i32
    %3 = arith.muli %arg1, %c512_i32 : i32
    %4 = tpu.assume_multiple %3, 128 : i32
    %c0 = arith.constant 0 : index
    %c0_1 = arith.constant 0 : index
    %5 = vector.load %arg2[%c0, %c0_1] : memref<16x128xf32, #tpu.memory_space<vmem>>, vector<16x128xf32>
    %c0_2 = arith.constant 0 : index
    %c0_3 = arith.constant 0 : index
    %6 = vector.load %arg3[%c0_2, %c0_3] : memref<128x512xf32, #tpu.memory_space<vmem>>, vector<128x512xf32>
    %cst = arith.constant dense<0.000000e+00> : vector<16x512xf32>
    %7 = tpu.matmul %5, %6, %cst {dimension_numbers = #tpu.dot_dimension_numbers<[1], [0], [0], [1], [0, 0, 1, 1], [], []>} : vector<16x128xf32>, vector<128x512xf32>, vector<16x512xf32> -> vector<16x512xf32>
    %c0_4 = arith.constant 0 : index
    %8 = arith.index_cast %4 : i32 to index
    %9 = vector.load %arg4[%c0_4, %8] : memref<1x512xf32, #tpu.memory_space<vmem>>, vector<1x512xf32>
    %10 = vector.broadcast %9 : vector<1x512xf32> to vector<16x512xf32>
    %11 = arith.addf %7, %10 : vector<16x512xf32>
    %cst_5 = arith.constant 0.000000e+00 : f32
    %12 = vector.broadcast %cst_5 : f32 to vector<16x512xf32>
    %13 = arith.maximumf %11, %12 : vector<16x512xf32>
    %c0_6 = arith.constant 0 : index
    %c0_7 = arith.constant 0 : index
    %14 = vector.load %arg7[%c0_6, %c0_7] : memref<16x128xf32, #tpu.memory_space<vmem>>, vector<16x128xf32>
    %c0_8 = arith.constant 0 : index
    %c0_9 = arith.constant 0 : index
    %15 = vector.load %arg5[%c0_8, %c0_9] : memref<512x128xf32, #tpu.memory_space<vmem>>, vector<512x128xf32>
    %cst_10 = arith.constant dense<0.000000e+00> : vector<16x128xf32>
    %16 = tpu.matmul %13, %15, %cst_10 {dimension_numbers = #tpu.dot_dimension_numbers<[1], [0], [0], [1], [0, 0, 1, 1], [], []>} : vector<16x512xf32>, vector<512x128xf32>, vector<16x128xf32> -> vector<16x128xf32>
    %17 = arith.addf %14, %16 : vector<16x128xf32>
    %c0_11 = arith.constant 0 : index
    %c0_12 = arith.constant 0 : index
    %18 = vector.load %arg7[%c0_11, %c0_12] : memref<16x128xf32, #tpu.memory_space<vmem>>, vector<16x128xf32>
    tpu.vector_store %arg7[%c0_11, %c0_12], %17 {strides = array<i32>} : memref<16x128xf32, #tpu.memory_space<vmem>>, vector<16x128xf32>,
    %c0_i32_13 = arith.constant 0 : i32
    %19 = arith.cmpi eq, %arg1, %c0_i32_13 : i32
    %20 = arith.extui %19 : i1 to i32
    %c0_i32_14 = arith.constant 0 : i32
    %21 = arith.cmpi ne, %20, %c0_i32_14 : i32
    scf.if %21 {
      %c0_15 = arith.constant 0 : index
      %c0_16 = arith.constant 0 : index
      %22 = vector.load %arg7[%c0_15, %c0_16] : memref<16x128xf32, #tpu.memory_space<vmem>>, vector<16x128xf32>
      %c0_17 = arith.constant 0 : index
      %c0_18 = arith.constant 0 : index
      %23 = vector.load %arg6[%c0_17, %c0_18] : memref<1x128xf32, #tpu.memory_space<vmem>>, vector<1x128xf32>
      %24 = vector.broadcast %23 : vector<1x128xf32> to vector<16x128xf32>
      %25 = arith.addf %22, %24 : vector<16x128xf32>
      %c0_19 = arith.constant 0 : index
      %c0_20 = arith.constant 0 : index
      %26 = vector.load %arg7[%c0_19, %c0_20] : memref<16x128xf32, #tpu.memory_space<vmem>>, vector<16x128xf32>
      tpu.vector_store %arg7[%c0_19, %c0_20], %25 {strides = array<i32>} : memref<16x128xf32, #tpu.memory_space<vmem>>, vector<16x128xf32>,
    } else {
    }
    return
  }
  func.func @transform_0(%arg0: i32, %arg1: i32) -> (i32, i32) {
    %c0_i32 = arith.constant 0 : i32
    %c0_i32_0 = arith.constant 0 : i32
    return %arg0, %c0_i32 : i32, i32
  }
  func.func @transform_1(%arg0: i32, %arg1: i32) -> (i32, i32) {
    %c0_i32 = arith.constant 0 : i32
    %c0_i32_0 = arith.constant 0 : i32
    return %c0_i32, %arg1 : i32, i32
  }
  func.func @transform_2(%arg0: i32, %arg1: i32) -> (i32, i32) {
    %c0_i32 = arith.constant 0 : i32
    %c0_i32_0 = arith.constant 0 : i32
    %c0_i32_1 = arith.constant 0 : i32
    return %c0_i32, %c0_i32_0 : i32, i32
  }
  func.func @transform_3(%arg0: i32, %arg1: i32) -> (i32, i32) {
    %c0_i32 = arith.constant 0 : i32
    %c0_i32_0 = arith.constant 0 : i32
    return %arg1, %c0_i32 : i32, i32
  }
  func.func @transform_4(%arg0: i32, %arg1: i32) -> (i32, i32) {
    %c0_i32 = arith.constant 0 : i32
    %c0_i32_0 = arith.constant 0 : i32
    %c0_i32_1 = arith.constant 0 : i32
    return %c0_i32, %c0_i32_0 : i32, i32
  }
  func.func @transform_5(%arg0: i32, %arg1: i32) -> (i32, i32) {
    %c0_i32 = arith.constant 0 : i32
    %c0_i32_0 = arith.constant 0 : i32
    return %arg0, %c0_i32 : i32, i32
  }
}

</mosaic_0001>

<llo_original>
// kernel: tpu_custom_call.1
$region0: #{tpu_custom_call.1}
  #allocation0 [shape = 'u32[]', space=smem, size = 0x4, offset = 0x4, fixed_abs, tag = 'smem constant byte address 0x4 - core index']
  #allocation1 [shape = 'u32[144,128]{1,0:T(1,128)}', space=vmem, size = 0x12000, scoped, tag = 'internal scratch']
  %s0 = inlined_call_operand.hbm [shape: f32[16,128], index: 0, kind: input, shape index: {}]
  %s1 = inlined_call_operand.hbm [shape: f32[128,512], index: 1, kind: input, shape index: {}]
  %s2 = inlined_call_operand.hbm [shape: f32[1,512], index: 2, kind: input, shape index: {}]
  %s3 = inlined_call_operand.hbm [shape: f32[512,128], index: 3, kind: input, shape index: {}]
  %s4 = inlined_call_operand.vmem [shape: f32[1,128], index: 4, kind: input, shape index: {}]
  %s5 = inlined_call_operand.hbm [shape: f32[16,128], index: 5, kind: output, shape index: {}]
  %s6 = sld [smem:[#allocation0]]
  $region54: #{tpu_custom_call.1} parent=0
    _
  %s8 = ssub.s32 1, %s6
  %s9 = scalar_select 0, %s8, %s6
  $region1: #{tpu_custom_call.1} parent=0
    #allocation2 [shape = 'u8[8192]{0}', space=vmem, size = 0x2000, scoped, tag = 'input window, operand 0, single buffered']
    #allocation3 [shape = 's32[1]{0}', space=sflag, size = 0x4, scoped, tag = 'scoped memory for tpu_custom_call.1']
    #allocation4 [shape = 's32[1]{0}', space=sflag, size = 0x4, scoped, tag = 'scoped memory for tpu_custom_call.1']
    #allocation5 [shape = 'u8[262144]{0}', space=vmem, size = 0x40000, scoped, tag = 'input window, operand 1, single buffered']
    #allocation6 [shape = 's32[1]{0}', space=sflag, size = 0x4, scoped, tag = 'scoped memory for tpu_custom_call.1']
    #allocation7 [shape = 'u8[2048]{0}', space=vmem, size = 0x800, scoped, tag = 'input window, operand 2, single buffered']
    #allocation8 [shape = 'u8[262144]{0}', space=vmem, size = 0x40000, scoped, tag = 'input window, operand 3, single buffered']
    #allocation9 [shape = 's32[1]{0}', space=sflag, size = 0x4, scoped, tag = 'scoped memory for tpu_custom_call.1']
    #allocation10 [shape = 'u8[8192]{0}', space=vmem, size = 0x2000, scoped, tag = 'output window, operand 0, single buffered']
    %10 = vsyncpa [#allocation3], 0
    %11 = vsyncpa [#allocation6], 0
    %12 = vsyncpa [#allocation9], 0
    %13 = vsyncpa [#allocation4], 0
    // Predicated region
    $region2: #{tpu_custom_call.1} parent=1 // pred_check
      _
    $region3: #{tpu_custom_call.1} parent=1 // pred_check_branch
      %15 = sbr.rel (0) target = $region5
    $region4: #{tpu_custom_call.1} parent=1 // pred_region
      %s17 = ssub.s32 256, 256
      %18 = vsyncadd [#allocation3], %s17
      %s19 = sshll.u32 [#allocation2], 4
      %s20 = int_to_ptr.vmem [resolvable:$true] %s19
      %25 = dma.hbm_to_vmem [thread:$0]  %s0, 256, %s20, [#allocation3], 128, 128, 8
    $region5: #{tpu_custom_call.1} parent=1 // pred_fallthru
      _
    // Predicated region
    $region6: #{tpu_custom_call.1} parent=1 // pred_check
      _
    $region7: #{tpu_custom_call.1} parent=1 // pred_check_branch
      %27 = sbr.rel (0) target = $region9
    $region8: #{tpu_custom_call.1} parent=1 // pred_region
      %s29 = ssub.s32 8192, 8192
      %30 = vsyncadd [#allocation6], %s29
      %s31 = sshll.u32 [#allocation5], 4
      %s32 = int_to_ptr.vmem [resolvable:$true] %s31
      %37 = dma.hbm_to_vmem [thread:$0]  %s1, 8192, %s32, [#allocation6], 512, 512, 32
    $region9: #{tpu_custom_call.1} parent=1 // pred_fallthru
      _
    // Predicated region
    $region10: #{tpu_custom_call.1} parent=1 // pred_check
      _
    $region11: #{tpu_custom_call.1} parent=1 // pred_check_branch
      %39 = sbr.rel (0) target = $region13
    $region12: #{tpu_custom_call.1} parent=1 // pred_region
      %s41 = ssub.s32 64, 64
      %42 = vsyncadd [#allocation6], %s41
      %s44 = sshll.u32 [#allocation7], 4
      %s45 = int_to_ptr.vmem [resolvable:$true] %s44
      %47 = dma.hbm_to_vmem [thread:$0]  %s2, 64, %s45, [#allocation6]
    $region13: #{tpu_custom_call.1} parent=1 // pred_fallthru
      _
    // Predicated region
    $region14: #{tpu_custom_call.1} parent=1 // pred_check
      _
    $region15: #{tpu_custom_call.1} parent=1 // pred_check_branch
      %49 = sbr.rel (0) target = $region17
    $region16: #{tpu_custom_call.1} parent=1 // pred_region
      %s51 = ssub.s32 8192, 8192
      %52 = vsyncadd [#allocation9], %s51
      %s53 = sshll.u32 [#allocation8], 4
      %s54 = int_to_ptr.vmem [resolvable:$true] %s53
      %59 = dma.hbm_to_vmem [thread:$0]  %s3, 8192, %s54, [#allocation9], 128, 128, 8
    $region17: #{tpu_custom_call.1} parent=1 // pred_fallthru
      _
    // Predicated region
    $region18: #{tpu_custom_call.1} parent=1 // pred_check
      _
    $region19: #{tpu_custom_call.1} parent=1 // pred_check_branch
      %61 = sbr.rel (0) target = $region21
    $region20: #{tpu_custom_call.1} parent=1 // pred_region
      _
    $region21: #{tpu_custom_call.1} parent=1 // pred_fallthru
      _
    // Predicated region
    $region22: #{tpu_custom_call.1} parent=1 // pred_check
      _
    $region23: #{tpu_custom_call.1} parent=1 // pred_check_branch
      %63 = sbr.rel (0) target = $region25
    $region24: #{tpu_custom_call.1} parent=1 // pred_region
      %64 = dma.done [#allocation3], 256
    $region25: #{tpu_custom_call.1} parent=1 // pred_fallthru
      _
    // Predicated region
    $region26: #{tpu_custom_call.1} parent=1 // pred_check
      _
    $region27: #{tpu_custom_call.1} parent=1 // pred_check_branch
      %66 = sbr.rel (0) target = $region29
    $region28: #{tpu_custom_call.1} parent=1 // pred_region
      %67 = dma.done [#allocation6], 8192
    $region29: #{tpu_custom_call.1} parent=1 // pred_fallthru
      _
    // Predicated region
    $region30: #{tpu_custom_call.1} parent=1 // pred_check
      _
    $region31: #{tpu_custom_call.1} parent=1 // pred_check_branch
      %69 = sbr.rel (0) target = $region33
    $region32: #{tpu_custom_call.1} parent=1 // pred_region
      %70 = dma.done [#allocation6], 64
    $region33: #{tpu_custom_call.1} parent=1 // pred_fallthru
      _
    // Predicated region
    $region34: #{tpu_custom_call.1} parent=1 // pred_check
      _
    $region35: #{tpu_custom_call.1} parent=1 // pred_check_branch
      %72 = sbr.rel (0) target = $region37
    $region36: #{tpu_custom_call.1} parent=1 // pred_region
      %73 = dma.done [#allocation9], 8192
    $region37: #{tpu_custom_call.1} parent=1 // pred_fallthru
      _
    %p74 = scmp.eq.s32.totalorder 0, 0
    // Predicated region
    $region38: #{tpu_custom_call.1} parent=1 // pred_check
      %p75 = pneg %p74
    $region39: #{tpu_custom_call.1} parent=1 // pred_check_branch
      %77 = sbr.rel (%p75) target = $region41
    $region40: #{tpu_custom_call.1} parent=1 // pred_region
      %78 = vst [vmem:[#allocation10] sm:$0xff] 0.0
      %79 = vst [vmem:[#allocation10 + $0x8] sm:$0xff] 0.0
    $region41: #{tpu_custom_call.1} parent=1 // pred_fallthru
      _
    %s80 = smul.u32 0, 512
    %v81 = vld [vmem:[#allocation2] sm:$0xff]
    %v82 = vld [vmem:[#allocation2 + $0x8] sm:$0xff]
    %v83 = vld [vmem:[#allocation5] sm:$0xff]
    %v84 = vld [vmem:[#allocation5 + $0x8] sm:$0xff]
    %v85 = vld [vmem:[#allocation5 + $0x10] sm:$0xff]
    %v86 = vld [vmem:[#allocation5 + $0x18] sm:$0xff]
    %v87 = vld [vmem:[#allocation5 + $0x20] sm:$0xff]
    %v88 = vld [vmem:[#allocation5 + $0x28] sm:$0xff]
    %v89 = vld [vmem:[#allocation5 + $0x30] sm:$0xff]
    %v90 = vld [vmem:[#allocation5 + $0x38] sm:$0xff]
    %v91 = vld [vmem:[#allocation5 + $0x40] sm:$0xff]
    %v92 = vld [vmem:[#allocation5 + $0x48] sm:$0xff]
    %v93 = vld [vmem:[#allocation5 + $0x50] sm:$0xff]
    %v94 = vld [vmem:[#allocation5 + $0x58] sm:$0xff]
    %v95 = vld [vmem:[#allocation5 + $0x60] sm:$0xff]
    %v96 = vld [vmem:[#allocation5 + $0x68] sm:$0xff]
    %v97 = vld [vmem:[#allocation5 + $0x70] sm:$0xff]
    %v98 = vld [vmem:[#allocation5 + $0x78] sm:$0xff]
    %v99 = vld [vmem:[#allocation5 + $0x80] sm:$0xff]
    %v100 = vld [vmem:[#allocation5 + $0x88] sm:$0xff]
    %v101 = vld [vmem:[#allocation5 + $0x90] sm:$0xff]
    %v102 = vld [vmem:[#allocation5 + $0x98] sm:$0xff]
    %v103 = vld [vmem:[#allocation5 + $0xa0] sm:$0xff]
    %v104 = vld [vmem:[#allocation5 + $0xa8] sm:$0xff]
    %v105 = vld [vmem:[#allocation5 + $0xb0] sm:$0xff]
    %v106 = vld [vmem:[#allocation5 + $0xb8] sm:$0xff]
    %v107 = vld [vmem:[#allocation5 + $0xc0] sm:$0xff]
    %v108 = vld [vmem:[#allocation5 + $0xc8] sm:$0xff]
    %v109 = vld [vmem:[#allocation5 + $0xd0] sm:$0xff]
    %v110 = vld [vmem:[#allocation5 + $0xd8] sm:$0xff]
    %v111 = vld [vmem:[#allocation5 + $0xe0] sm:$0xff]
    %v112 = vld [vmem:[#allocation5 + $0xe8] sm:$0xff]
    %v113 = vld [vmem:[#allocation5 + $0xf0] sm:$0xff]
    %v114 = vld [vmem:[#allocation5 + $0xf8] sm:$0xff]
    %v115 = vld [vmem:[#allocation5 + $0x100] sm:$0xff]
    %v116 = vld [vmem:[#allocation5 + $0x108] sm:$0xff]
    %v117 = vld [vmem:[#allocation5 + $0x110] sm:$0xff]
    %v118 = vld [vmem:[#allocation5 + $0x118] sm:$0xff]
    %v119 = vld [vmem:[#allocation5 + $0x120] sm:$0xff]
    %v120 = vld [vmem:[#allocation5 + $0x128] sm:$0xff]
    %v121 = vld [vmem:[#allocation5 + $0x130] sm:$0xff]
    %v122 = vld [vmem:[#allocation5 + $0x138] sm:$0xff]
    %v123 = vld [vmem:[#allocation5 + $0x140] sm:$0xff]
    %v124 = vld [vmem:[#allocation5 + $0x148] sm:$0xff]
    %v125 = vld [vmem:[#allocation5 + $0x150] sm:$0xff]
    %v126 = vld [vmem:[#allocation5 + $0x158] sm:$0xff]
    %v127 = vld [vmem:[#allocation5 + $0x160] sm:$0xff]
    %v128 = vld [vmem:[#allocation5 + $0x168] sm:$0xff]
    %v129 = vld [vmem:[#allocation5 + $0x170] sm:$0xff]
    %v130 = vld [vmem:[#allocation5 + $0x178] sm:$0xff]
    %v131 = vld [vmem:[#allocation5 + $0x180] sm:$0xff]
    %v132 = vld [vmem:[#allocation5 + $0x188] sm:$0xff]
    %v133 = vld [vmem:[#allocation5 + $0x190] sm:$0xff]
    %v134 = vld [vmem:[#allocation5 + $0x198] sm:$0xff]
    %v135 = vld [vmem:[#allocation5 + $0x1a0] sm:$0xff]
    %v136 = vld [vmem:[#allocation5 + $0x1a8] sm:$0xff]
    %v137 = vld [vmem:[#allocation5 + $0x1b0] sm:$0xff]
    %v138 = vld [vmem:[#allocation5 + $0x1b8] sm:$0xff]
    %v139 = vld [vmem:[#allocation5 + $0x1c0] sm:$0xff]
    %v140 = vld [vmem:[#allocation5 + $0x1c8] sm:$0xff]
    %v141 = vld [vmem:[#allocation5 + $0x1d0] sm:$0xff]
    %v142 = vld [vmem:[#allocation5 + $0x1d8] sm:$0xff]
    %v143 = vld [vmem:[#allocation5 + $0x1e0] sm:$0xff]
    %v144 = vld [vmem:[#allocation5 + $0x1e8] sm:$0xff]
    %v145 = vld [vmem:[#allocation5 + $0x1f0] sm:$0xff]
    %v146 = vld [vmem:[#allocation5 + $0x1f8] sm:$0xff]
    %s147 = sshra.s32 %s80, 7
    %s148 = sand.u32 %s80, 127
    %s149 = scalar_lea.vmem [#allocation7], %s147
    %v150 = vld [vmem:[%s149] sm:$0xf]
    %v152 = vlaneseq
    %v153 = vshrl.u32 %v152, 7
    %v154 = vsub.s32 0, %v153
    %v155 = vrot.slane %v150, %v154
    %v156 = vlaneseq
    %v157 = vshrl.u32 %v156, 7
    %v158 = vsub.s32 1, %v157
    %v159 = vrot.slane %v150, %v158
    %v160 = vlaneseq
    %v161 = vshrl.u32 %v160, 7
    %v162 = vsub.s32 2, %v161
    %v163 = vrot.slane %v150, %v162
    %v164 = vlaneseq
    %v165 = vshrl.u32 %v164, 7
    %v166 = vsub.s32 3, %v165
    %v167 = vrot.slane %v150, %v166
    %172 = vmatprep.subr.mxu0 %v144
    %173 = vmatpush1.msra.mxu0 %v143
    %174 = vmatprep.subr.mxu0 %v140
    %175 = vmatpush1.msra.mxu0 %v139
    %176 = vmatprep.subr.mxu0 %v136
    %177 = vmatpush1.msra.mxu0 %v135
    %178 = vmatprep.subr.mxu0 %v132
    %179 = vmatpush1.msra.mxu0 %v131
    %180 = vmatprep.subr.mxu0 %v128
    %181 = vmatpush1.msra.mxu0 %v127
    %182 = vmatprep.subr.mxu0 %v124
    %183 = vmatpush1.msra.mxu0 %v123
    %184 = vmatprep.subr.mxu0 %v120
    %185 = vmatpush1.msra.mxu0 %v119
    %186 = vmatprep.subr.mxu0 %v116
    %187 = vmatpush1.msra.mxu0 %v115
    %188 = vmatprep.subr.mxu0 %v112
    %189 = vmatpush1.msra.mxu0 %v111
    %190 = vmatprep.subr.mxu0 %v108
    %191 = vmatpush1.msra.mxu0 %v107
    %192 = vmatprep.subr.mxu0 %v104
    %193 = vmatpush1.msra.mxu0 %v103
    %194 = vmatprep.subr.mxu0 %v100
    %195 = vmatpush1.msra.mxu0 %v99
    %196 = vmatprep.subr.mxu0 %v96
    %197 = vmatpush1.msra.mxu0 %v95
    %198 = vmatprep.subr.mxu0 %v92
    %199 = vmatpush1.msra.mxu0 %v91
    %200 = vmatprep.subr.mxu0 %v88
    %201 = vmatpush1.msra.mxu0 %v87
    %202 = vmatprep.subr.mxu0 %v84
    %203 = vmatpush1.msra.mxu0 %v83
    %204 = vmatprep.subr.mxu0 0.0
    %205 = vmatpush2.msra.mxu0 0.0
    %206 = vmatprep.subr.mxu0 0.0
    %207 = vmatpush2.msra.mxu0 0.0
    %208 = vmatprep.subr.mxu0 0.0
    %209 = vmatpush2.msra.mxu0 0.0
    %210 = vmatprep.subr.mxu0 0.0
    %211 = vmatpush2.msra.mxu0 0.0
    %212 = vmatprep.subr.mxu0 0.0
    %213 = vmatpush2.msra.mxu0 0.0
    %214 = vmatprep.subr.mxu0 0.0
    %215 = vmatpush2.msra.mxu0 0.0
    %216 = vmatprep.subr.mxu0 0.0
    %217 = vmatpush2.msra.mxu0 0.0
    %218 = vmatprep.subr.mxu0 0.0
    %219 = vmatpush2.msra.mxu0 0.0
    %220 = vmatprep.subr.mxu0 0.0
    %221 = vmatpush2.msra.mxu0 0.0
    %222 = vmatprep.subr.mxu0 0.0
    %223 = vmatpush2.msra.mxu0 0.0
    %224 = vmatprep.subr.mxu0 0.0
    %225 = vmatpush2.msra.mxu0 0.0
    %226 = vmatprep.subr.mxu0 0.0
    %227 = vmatpush2.msra.mxu0 0.0
    %228 = vmatprep.subr.mxu0 0.0
    %229 = vmatpush2.msra.mxu0 0.0
    %230 = vmatprep.subr.mxu0 0.0
    %231 = vmatpush2.msra.mxu0 0.0
    %232 = vmatprep.subr.mxu0 0.0
    %233 = vmatpush2.msra.mxu0 0.0
    %234 = vmatprep.subr.mxu0 0.0
    %235 = vmatpush2.msra.mxu0 0.0
    %236 = vmatprep.mubr.f32.mxu0 0.0
    %237 = vmatmul.mubr.f32.gmra.mxu0 %v81
    %v238 = vpop.f32.mrf.mxu0
    %v239 = vadd.f32 %v155, %v238
    %v240 = vpop.f32.mrf.mxu0
    %v241 = vadd.f32 %v159, %v240
    %242 = vmatprep.mubr.f32.mxu0 0.0
    %243 = vmatmul.mubr.f32.gmra.mxu0 %v82
    %v244 = vpop.f32.mrf.mxu0
    %v245 = vadd.f32 %v155, %v244
    %v246 = vpop.f32.mrf.mxu0
    %v247 = vadd.f32 %v159, %v246
    %248 = vdwg.mxu0
    %249 = vmatprep.subr.mxu0 %v146
    %250 = vmatpush1.msra.mxu0 %v145
    %251 = vmatprep.subr.mxu0 %v142
    %252 = vmatpush1.msra.mxu0 %v141
    %253 = vmatprep.subr.mxu0 %v138
    %254 = vmatpush1.msra.mxu0 %v137
    %255 = vmatprep.subr.mxu0 %v134
    %256 = vmatpush1.msra.mxu0 %v133
    %257 = vmatprep.subr.mxu0 %v130
    %258 = vmatpush1.msra.mxu0 %v129
    %259 = vmatprep.subr.mxu0 %v126
    %260 = vmatpush1.msra.mxu0 %v125
    %261 = vmatprep.subr.mxu0 %v122
    %262 = vmatpush1.msra.mxu0 %v121
    %263 = vmatprep.subr.mxu0 %v118
    %264 = vmatpush1.msra.mxu0 %v117
    %265 = vmatprep.subr.mxu0 %v114
    %266 = vmatpush1.msra.mxu0 %v113
    %267 = vmatprep.subr.mxu0 %v110
    %268 = vmatpush1.msra.mxu0 %v109
    %269 = vmatprep.subr.mxu0 %v106
    %270 = vmatpush1.msra.mxu0 %v105
    %271 = vmatprep.subr.mxu0 %v102
    %272 = vmatpush1.msra.mxu0 %v101
    %273 = vmatprep.subr.mxu0 %v98
    %274 = vmatpush1.msra.mxu0 %v97
    %275 = vmatprep.subr.mxu0 %v94
    %276 = vmatpush1.msra.mxu0 %v93
    %277 = vmatprep.subr.mxu0 %v90
    %278 = vmatpush1.msra.mxu0 %v89
    %279 = vmatprep.subr.mxu0 %v86
    %280 = vmatpush1.msra.mxu0 %v85
    %281 = vmatprep.subr.mxu0 0.0
    %282 = vmatpush2.msra.mxu0 0.0
    %283 = vmatprep.subr.mxu0 0.0
    %284 = vmatpush2.msra.mxu0 0.0
    %285 = vmatprep.subr.mxu0 0.0
    %286 = vmatpush2.msra.mxu0 0.0
    %287 = vmatprep.subr.mxu0 0.0
    %288 = vmatpush2.msra.mxu0 0.0
    %289 = vmatprep.subr.mxu0 0.0
    %290 = vmatpush2.msra.mxu0 0.0
    %291 = vmatprep.subr.mxu0 0.0
    %292 = vmatpush2.msra.mxu0 0.0
    %293 = vmatprep.subr.mxu0 0.0
    %294 = vmatpush2.msra.mxu0 0.0
    %295 = vmatprep.subr.mxu0 0.0
    %296 = vmatpush2.msra.mxu0 0.0
    %297 = vmatprep.subr.mxu0 0.0
    %298 = vmatpush2.msra.mxu0 0.0
    %299 = vmatprep.subr.mxu0 0.0
    %300 = vmatpush2.msra.mxu0 0.0
    %301 = vmatprep.subr.mxu0 0.0
    %302 = vmatpush2.msra.mxu0 0.0
    %303 = vmatprep.subr.mxu0 0.0
    %304 = vmatpush2.msra.mxu0 0.0
    %305 = vmatprep.subr.mxu0 0.0
    %306 = vmatpush2.msra.mxu0 0.0
    %307 = vmatprep.subr.mxu0 0.0
    %308 = vmatpush2.msra.mxu0 0.0
    %309 = vmatprep.subr.mxu0 0.0
    %310 = vmatpush2.msra.mxu0 0.0
    %311 = vmatprep.subr.mxu0 0.0
    %312 = vmatpush2.msra.mxu0 0.0
    %313 = vmatprep.mubr.f32.mxu0 0.0
    %314 = vmatmul.mubr.f32.gmra.mxu0 %v81
    %v315 = vpop.f32.mrf.mxu0
    %v316 = vadd.f32 %v163, %v315
    %v317 = vpop.f32.mrf.mxu0
    %v318 = vadd.f32 %v167, %v317
    %319 = vmatprep.mubr.f32.mxu0 0.0
    %320 = vmatmul.mubr.f32.gmra.mxu0 %v82
    %v321 = vpop.f32.mrf.mxu0
    %v322 = vadd.f32 %v163, %v321
    %v323 = vpop.f32.mrf.mxu0
    %v324 = vadd.f32 %v167, %v323
    %325 = vdwg.mxu0
    %v326 = vmax.f32 %v239, 0.0
    %v327 = vmax.f32 %v241, 0.0
    %v328 = vmax.f32 %v316, 0.0
    %v329 = vmax.f32 %v318, 0.0
    %v330 = vmax.f32 %v245, 0.0
    %v331 = vmax.f32 %v247, 0.0
    %v332 = vmax.f32 %v322, 0.0
    %v333 = vmax.f32 %v324, 0.0
    %v334 = vld [vmem:[#allocation10] sm:$0xff]
    %v335 = vld [vmem:[#allocation10 + $0x8] sm:$0xff]
    %v336 = vld [vmem:[#allocation8] sm:$0xff]
    %v337 = vld [vmem:[#allocation8 + $0x8] sm:$0xff]
    %v338 = vld [vmem:[#allocation8 + $0x10] sm:$0xff]
    %v339 = vld [vmem:[#allocation8 + $0x18] sm:$0xff]
    %v340 = vld [vmem:[#allocation8 + $0x20] sm:$0xff]
    %v341 = vld [vmem:[#allocation8 + $0x28] sm:$0xff]
    %v342 = vld [vmem:[#allocation8 + $0x30] sm:$0xff]
    %v343 = vld [vmem:[#allocation8 + $0x38] sm:$0xff]
    %v344 = vld [vmem:[#allocation8 + $0x40] sm:$0xff]
    %v345 = vld [vmem:[#allocation8 + $0x48] sm:$0xff]
    %v346 = vld [vmem:[#allocation8 + $0x50] sm:$0xff]
    %v347 = vld [vmem:[#allocation8 + $0x58] sm:$0xff]
    %v348 = vld [vmem:[#allocation8 + $0x60] sm:$0xff]
    %v349 = vld [vmem:[#allocation8 + $0x68] sm:$0xff]
    %v350 = vld [vmem:[#allocation8 + $0x70] sm:$0xff]
    %v351 = vld [vmem:[#allocation8 + $0x78] sm:$0xff]
    %v352 = vld [vmem:[#allocation8 + $0x80] sm:$0xff]
    %v353 = vld [vmem:[#allocation8 + $0x88] sm:$0xff]
    %v354 = vld [vmem:[#allocation8 + $0x90] sm:$0xff]
    %v355 = vld [vmem:[#allocation8 + $0x98] sm:$0xff]
    %v356 = vld [vmem:[#allocation8 + $0xa0] sm:$0xff]
    %v357 = vld [vmem:[#allocation8 + $0xa8] sm:$0xff]
    %v358 = vld [vmem:[#allocation8 + $0xb0] sm:$0xff]
    %v359 = vld [vmem:[#allocation8 + $0xb8] sm:$0xff]
    %v360 = vld [vmem:[#allocation8 + $0xc0] sm:$0xff]
    %v361 = vld [vmem:[#allocation8 + $0xc8] sm:$0xff]
    %v362 = vld [vmem:[#allocation8 + $0xd0] sm:$0xff]
    %v363 = vld [vmem:[#allocation8 + $0xd8] sm:$0xff]
    %v364 = vld [vmem:[#allocation8 + $0xe0] sm:$0xff]
    %v365 = vld [vmem:[#allocation8 + $0xe8] sm:$0xff]
    %v366 = vld [vmem:[#allocation8 + $0xf0] sm:$0xff]
    %v367 = vld [vmem:[#allocation8 + $0xf8] sm:$0xff]
    %v368 = vld [vmem:[#allocation8 + $0x100] sm:$0xff]
    %v369 = vld [vmem:[#allocation8 + $0x108] sm:$0xff]
    %v370 = vld [vmem:[#allocation8 + $0x110] sm:$0xff]
    %v371 = vld [vmem:[#allocation8 + $0x118] sm:$0xff]
    %v372 = vld [vmem:[#allocation8 + $0x120] sm:$0xff]
    %v373 = vld [vmem:[#allocation8 + $0x128] sm:$0xff]
    %v374 = vld [vmem:[#allocation8 + $0x130] sm:$0xff]
    %v375 = vld [vmem:[#allocation8 + $0x138] sm:$0xff]
    %v376 = vld [vmem:[#allocation8 + $0x140] sm:$0xff]
    %v377 = vld [vmem:[#allocation8 + $0x148] sm:$0xff]
    %v378 = vld [vmem:[#allocation8 + $0x150] sm:$0xff]
    %v379 = vld [vmem:[#allocation8 + $0x158] sm:$0xff]
    %v380 = vld [vmem:[#allocation8 + $0x160] sm:$0xff]
    %v381 = vld [vmem:[#allocation8 + $0x168] sm:$0xff]
    %v382 = vld [vmem:[#allocation8 + $0x170] sm:$0xff]
    %v383 = vld [vmem:[#allocation8 + $0x178] sm:$0xff]
    %v384 = vld [vmem:[#allocation8 + $0x180] sm:$0xff]
    %v385 = vld [vmem:[#allocation8 + $0x188] sm:$0xff]
    %v386 = vld [vmem:[#allocation8 + $0x190] sm:$0xff]
    %v387 = vld [vmem:[#allocation8 + $0x198] sm:$0xff]
    %v388 = vld [vmem:[#allocation8 + $0x1a0] sm:$0xff]
    %v389 = vld [vmem:[#allocation8 + $0x1a8] sm:$0xff]
    %v390 = vld [vmem:[#allocation8 + $0x1b0] sm:$0xff]
    %v391 = vld [vmem:[#allocation8 + $0x1b8] sm:$0xff]
    %v392 = vld [vmem:[#allocation8 + $0x1c0] sm:$0xff]
    %v393 = vld [vmem:[#allocation8 + $0x1c8] sm:$0xff]
    %v394 = vld [vmem:[#allocation8 + $0x1d0] sm:$0xff]
    %v395 = vld [vmem:[#allocation8 + $0x1d8] sm:$0xff]
    %v396 = vld [vmem:[#allocation8 + $0x1e0] sm:$0xff]
    %v397 = vld [vmem:[#allocation8 + $0x1e8] sm:$0xff]
    %v398 = vld [vmem:[#allocation8 + $0x1f0] sm:$0xff]
    %v399 = vld [vmem:[#allocation8 + $0x1f8] sm:$0xff]
    %400 = vmatprep.subr.mxu0 0.0
    %401 = vmatpush1.msra.mxu0 %v351
    %402 = vmatprep.subr.mxu0 0.0
    %403 = vmatpush1.msra.mxu0 %v350
    %404 = vmatprep.subr.mxu0 0.0
    %405 = vmatpush1.msra.mxu0 %v349
    %406 = vmatprep.subr.mxu0 0.0
    %407 = vmatpush1.msra.mxu0 %v348
    %408 = vmatprep.subr.mxu0 0.0
    %409 = vmatpush1.msra.mxu0 %v347
    %410 = vmatprep.subr.mxu0 0.0
    %411 = vmatpush1.msra.mxu0 %v346
    %412 = vmatprep.subr.mxu0 0.0
    %413 = vmatpush1.msra.mxu0 %v345
    %414 = vmatprep.subr.mxu0 0.0
    %415 = vmatpush1.msra.mxu0 %v344
    %416 = vmatprep.subr.mxu0 0.0
    %417 = vmatpush1.msra.mxu0 %v343
    %418 = vmatprep.subr.mxu0 0.0
    %419 = vmatpush1.msra.mxu0 %v342
    %420 = vmatprep.subr.mxu0 0.0
    %421 = vmatpush1.msra.mxu0 %v341
    %422 = vmatprep.subr.mxu0 0.0
    %423 = vmatpush1.msra.mxu0 %v340
    %424 = vmatprep.subr.mxu0 0.0
    %425 = vmatpush1.msra.mxu0 %v339
    %426 = vmatprep.subr.mxu0 0.0
    %427 = vmatpush1.msra.mxu0 %v338
    %428 = vmatprep.subr.mxu0 0.0
    %429 = vmatpush1.msra.mxu0 %v337
    %430 = vmatprep.subr.mxu0 0.0
    %431 = vmatpush1.msra.mxu0 %v336
    %432 = vmatprep.subr.mxu0 0.0
    %433 = vmatpush2.msra.mxu0 %v367
    %434 = vmatprep.subr.mxu0 0.0
    %435 = vmatpush2.msra.mxu0 %v366
    %436 = vmatprep.subr.mxu0 0.0
    %437 = vmatpush2.msra.mxu0 %v365
    %438 = vmatprep.subr.mxu0 0.0
    %439 = vmatpush2.msra.mxu0 %v364
    %440 = vmatprep.subr.mxu0 0.0
    %441 = vmatpush2.msra.mxu0 %v363
    %442 = vmatprep.subr.mxu0 0.0
    %443 = vmatpush2.msra.mxu0 %v362
    %444 = vmatprep.subr.mxu0 0.0
    %445 = vmatpush2.msra.mxu0 %v361
    %446 = vmatprep.subr.mxu0 0.0
    %447 = vmatpush2.msra.mxu0 %v360
    %448 = vmatprep.subr.mxu0 0.0
    %449 = vmatpush2.msra.mxu0 %v359
    %450 = vmatprep.subr.mxu0 0.0
    %451 = vmatpush2.msra.mxu0 %v358
    %452 = vmatprep.subr.mxu0 0.0
    %453 = vmatpush2.msra.mxu0 %v357
    %454 = vmatprep.subr.mxu0 0.0
    %455 = vmatpush2.msra.mxu0 %v356
    %456 = vmatprep.subr.mxu0 0.0
    %457 = vmatpush2.msra.mxu0 %v355
    %458 = vmatprep.subr.mxu0 0.0
    %459 = vmatpush2.msra.mxu0 %v354
    %460 = vmatprep.subr.mxu0 0.0
    %461 = vmatpush2.msra.mxu0 %v353
    %462 = vmatprep.subr.mxu0 0.0
    %463 = vmatpush2.msra.mxu0 %v352
    %464 = vmatprep.mubr.f32.mxu0 %v327
    %465 = vmatmul.mubr.f32.gmra.mxu0 %v326
    %v466 = vpop.f32.mrf.mxu0
    %v467 = vadd.f32 0.0, %v466
    %v468 = vpop.f32.mrf.mxu0
    %469 = vmatprep.mubr.f32.mxu0 %v331
    %470 = vmatmul.mubr.f32.gmra.mxu0 %v330
    %v471 = vpop.f32.mrf.mxu0
    %v472 = vadd.f32 0.0, %v471
    %v473 = vpop.f32.mrf.mxu0
    %474 = vdwg.mxu0
    %475 = vmatprep.subr.mxu0 0.0
    %476 = vmatpush1.msra.mxu0 %v383
    %477 = vmatprep.subr.mxu0 0.0
    %478 = vmatpush1.msra.mxu0 %v382
    %479 = vmatprep.subr.mxu0 0.0
    %480 = vmatpush1.msra.mxu0 %v381
    %481 = vmatprep.subr.mxu0 0.0
    %482 = vmatpush1.msra.mxu0 %v380
    %483 = vmatprep.subr.mxu0 0.0
    %484 = vmatpush1.msra.mxu0 %v379
    %485 = vmatprep.subr.mxu0 0.0
    %486 = vmatpush1.msra.mxu0 %v378
    %487 = vmatprep.subr.mxu0 0.0
    %488 = vmatpush1.msra.mxu0 %v377
    %489 = vmatprep.subr.mxu0 0.0
    %490 = vmatpush1.msra.mxu0 %v376
    %491 = vmatprep.subr.mxu0 0.0
    %492 = vmatpush1.msra.mxu0 %v375
    %493 = vmatprep.subr.mxu0 0.0
    %494 = vmatpush1.msra.mxu0 %v374
    %495 = vmatprep.subr.mxu0 0.0
    %496 = vmatpush1.msra.mxu0 %v373
    %497 = vmatprep.subr.mxu0 0.0
    %498 = vmatpush1.msra.mxu0 %v372
    %499 = vmatprep.subr.mxu0 0.0
    %500 = vmatpush1.msra.mxu0 %v371
    %501 = vmatprep.subr.mxu0 0.0
    %502 = vmatpush1.msra.mxu0 %v370
    %503 = vmatprep.subr.mxu0 0.0
    %504 = vmatpush1.msra.mxu0 %v369
    %505 = vmatprep.subr.mxu0 0.0
    %506 = vmatpush1.msra.mxu0 %v368
    %507 = vmatprep.subr.mxu0 0.0
    %508 = vmatpush2.msra.mxu0 %v399
    %509 = vmatprep.subr.mxu0 0.0
    %510 = vmatpush2.msra.mxu0 %v398
    %511 = vmatprep.subr.mxu0 0.0
    %512 = vmatpush2.msra.mxu0 %v397
    %513 = vmatprep.subr.mxu0 0.0
    %514 = vmatpush2.msra.mxu0 %v396
    %515 = vmatprep.subr.mxu0 0.0
    %516 = vmatpush2.msra.mxu0 %v395
    %517 = vmatprep.subr.mxu0 0.0
    %518 = vmatpush2.msra.mxu0 %v394
    %519 = vmatprep.subr.mxu0 0.0
    %520 = vmatpush2.msra.mxu0 %v393
    %521 = vmatprep.subr.mxu0 0.0
    %522 = vmatpush2.msra.mxu0 %v392
    %523 = vmatprep.subr.mxu0 0.0
    %524 = vmatpush2.msra.mxu0 %v391
    %525 = vmatprep.subr.mxu0 0.0
    %526 = vmatpush2.msra.mxu0 %v390
    %527 = vmatprep.subr.mxu0 0.0
    %528 = vmatpush2.msra.mxu0 %v389
    %529 = vmatprep.subr.mxu0 0.0
    %530 = vmatpush2.msra.mxu0 %v388
    %531 = vmatprep.subr.mxu0 0.0
    %532 = vmatpush2.msra.mxu0 %v387
    %533 = vmatprep.subr.mxu0 0.0
    %534 = vmatpush2.msra.mxu0 %v386
    %535 = vmatprep.subr.mxu0 0.0
    %536 = vmatpush2.msra.mxu0 %v385
    %537 = vmatprep.subr.mxu0 0.0
    %538 = vmatpush2.msra.mxu0 %v384
    %539 = vmatprep.mubr.f32.mxu0 %v329
    %540 = vmatmul.mubr.f32.gmra.mxu0 %v328
    %v541 = vpop.f32.mrf.mxu0
    %v542 = vadd.f32 %v467, %v541
    %v543 = vpop.f32.mrf.mxu0
    %544 = vmatprep.mubr.f32.mxu0 %v333
    %545 = vmatmul.mubr.f32.gmra.mxu0 %v332
    %v546 = vpop.f32.mrf.mxu0
    %v547 = vadd.f32 %v472, %v546
    %v548 = vpop.f32.mrf.mxu0
    %549 = vdwg.mxu0
    %v550 = vadd.f32 %v334, %v542
    %v551 = vadd.f32 %v335, %v547
    %552 = vst [vmem:[#allocation10] sm:$0xff] %v550
    %553 = vst [vmem:[#allocation10 + $0x8] sm:$0xff] %v551
    // Predicated region
    $region42: #{tpu_custom_call.1} parent=1 // pred_check
      %p554 = pneg %p74
    $region43: #{tpu_custom_call.1} parent=1 // pred_check_branch
      %556 = sbr.rel (%p554) target = $region45
    $region44: #{tpu_custom_call.1} parent=1 // pred_region
      %v557 = vld [vmem:[#allocation10] sm:$0xff]
      %v558 = vld [vmem:[#allocation10 + $0x8] sm:$0xff]
      %v559 = vld [vmem:[%s4] sm:$0x1]
      %v561 = vlaneseq
      %v562 = vshrl.u32 %v561, 7
      %v563 = vsub.s32 0, %v562
      %v564 = vrot.slane %v559, %v563
      %v566 = vadd.f32 %v557, %v564
      %v567 = vadd.f32 %v558, %v564
      %568 = vst [vmem:[#allocation10] sm:$0xff] %v566
      %569 = vst [vmem:[#allocation10 + $0x8] sm:$0xff] %v567
    $region45: #{tpu_custom_call.1} parent=1 // pred_fallthru
      _
    // Predicated region
    $region46: #{tpu_custom_call.1} parent=1 // pred_check
      _
    $region47: #{tpu_custom_call.1} parent=1 // pred_check_branch
      %571 = sbr.rel (0) target = $region49
    $region48: #{tpu_custom_call.1} parent=1 // pred_region
      %s573 = ssub.s32 256, 256
      %574 = vsyncadd [#allocation4], %s573
      %s575 = sshll.u32 [#allocation10], 4
      %s576 = int_to_ptr.vmem [resolvable:$true] %s575
      %581 = dma.vmem_to_hbm [thread:$0]  %s576, 256, %s5, [#allocation4], 128, 128, 8
    $region49: #{tpu_custom_call.1} parent=1 // pred_fallthru
      _
    // Predicated region
    $region50: #{tpu_custom_call.1} parent=1 // pred_check
      _
    $region51: #{tpu_custom_call.1} parent=1 // pred_check_branch
      %583 = sbr.rel (0) target = $region53
    $region52: #{tpu_custom_call.1} parent=1 // pred_region
      %584 = dma.done [#allocation4], 256
    $region53: #{tpu_custom_call.1} parent=1 // pred_fallthru
      _
    %585 = vsyncpa [#allocation3], 1
    %586 = vsyncpa [#allocation6], 1
    %587 = vsyncpa [#allocation9], 1
    %588 = vsyncpa [#allocation4], 1

</llo_original>
